<compile_context>
chip_gen: v7x
topology: tpu7x:2x2x1
jax: 0.10.0
libtpu: 0.0.40
codegen_flags: <defaults>
</compile_context>

<pallas_src>
import numpy as np
import jax
import jax.numpy as jnp
from jax import lax
from jax.experimental import pallas as pl
from jax.experimental.pallas import tpu as pltpu


def _round_up(x, m):
    return ((x + m - 1) // m) * m


def _pick_tile_k(d_pad, tile_k):
    """Largest multiple-of-128 k-tile <= tile_k that divides d_pad (d_pad % 128 == 0)."""
    if d_pad <= tile_k:
        return d_pad
    for cand in range(tile_k, 127, -128):
        if d_pad % cand == 0:
            return cand
    return 128


def _pdist_kernel(ii_ref, jj_ref, a_ref, b_ref, sqr_ref, sqc_ref, out_ref):
    """Upper-tri tile of dist[i,j] = sqrt(max(|x_i|^2 + |x_j|^2 - 2 x_i.x_j, 1e-12))."""
    del ii_ref, jj_ref  # only consumed by the index_maps
    k = pl.program_id(1)

    @pl.when(k == 0)
    def _():
        out_ref[...] = jnp.zeros_like(out_ref)

    # NT matmul on the MXU: bf16 operands, f32 accumulation directly into the
    # k-resident f32 output block (no separate VMEM accumulator scratch).
    out_ref[...] += lax.dot_general(
        a_ref[...], b_ref[...],
        dimension_numbers=(((1,), (1,)), ((), ())),
        preferred_element_type=jnp.float32,
    )

    @pl.when(k == pl.num_programs(1) - 1)
    def _():
        # (TM,1) + (1,TN) broadcast-adds are pure VPU; sqrt finalize in place.
        d2 = sqr_ref[...] + sqc_ref[...] - 2.0 * out_ref[...]
        out_ref[...] = jnp.sqrt(jnp.maximum(d2, 1e-12))


def pairwise_dist(x, *, tile_n=512, tile_k=1024):
    """Full (n, n) Euclidean distance matrix via a tiled, symmetric Pallas kernel."""
    n, d = x.shape

    # Lane/sublane-aligned tiles, clamped to the (padded) problem size.
    tn = min(tile_n, _round_up(n, 128))
    n_pad = _round_up(n, tn)
    d_pad = _round_up(d, 128)          # pad K only to 128, not to tk
    tk = _pick_tile_k(d_pad, tile_k)   # tk divides d_pad -> no zero-K MXU passes

    x_f32 = jnp.pad(x.astype(jnp.float32), ((0, n_pad - n), (0, d_pad - d)))

    # Row squared norms precomputed once in f32 (tiny O(n*d) reduce by XLA),
    # fed as lane/sublane shaped operands so the kernel never transposes.
    sq = jnp.sum(x_f32 * x_f32, axis=1, keepdims=True)   # (n_pad, 1)
    sq_row = sq
    sq_col = sq.T                                        # (1, n_pad)

    # bf16 matmul operands: native MXU rate, half the HBM/VMEM input traffic.
    x_bf16 = x_f32.astype(jnp.bfloat16)

    n_tiles = n_pad // tn
    k_steps = d_pad // tk

    # Symmetry: visit only upper-triangular (i <= j) output tiles via a 1-D
    # triangle grid; tile indices are scalar-prefetched into SMEM.
    tri = [(i, j) for i in range(n_tiles) for j in range(i, n_tiles)]
    ii = jnp.asarray([p[0] for p in tri], dtype=jnp.int32)
    jj = jnp.asarray([p[1] for p in tri], dtype=jnp.int32)

    grid = (len(tri), k_steps)

    dist_ut = pl.pallas_call(
        _pdist_kernel,
        out_shape=jax.ShapeDtypeStruct((n_pad, n_pad), jnp.float32),
        grid_spec=pltpu.PrefetchScalarGridSpec(
            num_scalar_prefetch=2,
            grid=grid,
            in_specs=[
                pl.BlockSpec((tn, tk), lambda t, k, ii, jj: (ii[t], k)),   # row block of x
                pl.BlockSpec((tn, tk), lambda t, k, ii, jj: (jj[t], k)),   # col block of x
                pl.BlockSpec((tn, 1), lambda t, k, ii, jj: (ii[t], 0)),    # |x_i|^2
                pl.BlockSpec((1, tn), lambda t, k, ii, jj: (0, jj[t])),    # |x_j|^2
            ],
            out_specs=pl.BlockSpec((tn, tn), lambda t, k, ii, jj: (ii[t], jj[t])),
        ),
        compiler_params=pltpu.CompilerParams(
            dimension_semantics=("parallel", "arbitrary"),
            vmem_limit_bytes=32 * 1024 * 1024,
        ),
    )(ii, jj, x_bf16, x_bf16, sq_row, sq_col)

    # Mirror the computed upper triangle onto the (unvisited) lower triangle.
    dist_ut = dist_ut[:n, :n]
    r = jnp.arange(n)
    upper = r[:, None] <= r[None, :]
    return jnp.where(upper, dist_ut, dist_ut.T)


def contrastive_loss(inputs, targets, margin=0.0, np_seed=0):
    """Reproduces ContrastiveLoss.forward.

    Distance matrix on-TPU via Pallas; the random per-row positive/negative
    selection (np.random in the original) stays host-side.
    """
    n = inputs.shape[0]
    dist = pairwise_dist(inputs)            # Pallas kernel (hot path)
    dist = jax.block_until_ready(dist)
    dist_np = np.asarray(jax.device_get(dist))
    targets_np = np.asarray(jax.device_get(targets))

    # mask = targets.expand(n,n).eq(targets.expand(n,n).t())
    mask = targets_np[None, :] == targets_np[:, None]
    eye = (1 - np.eye(n)).astype(bool)
    mask_ap = mask & eye

    # TODO(synk): per-row random gather over variable-length boolean masks has
    # no clean static-shape Pallas equivalent; kept as host-side glue.
    rng = np.random.RandomState(np_seed)
    labels = rng.randint(0, 2, n)
    dist_ap, dist_an = [], []
    for i in range(n):
        if labels[i] == 1:
            temp = dist_np[i][mask_ap[i]]
            if temp.shape[0] == 0:      # singleton identity guard (original would crash)
                continue
            idx = rng.randint(0, temp.shape[0])
            dist_ap.append(temp[idx])
        else:
            temp = dist_np[i][~mask[i]]
            if temp.shape[0] == 0:
                continue
            idx = rng.randint(0, temp.shape[0])
            dist_an.append(temp[idx])

    dist_ap = np.asarray(dist_ap, dtype=np.float32)
    dist_an = np.asarray(dist_an, dtype=np.float32)

    loss = (1.0 * dist_ap.sum()
            + 1.0 * np.clip(margin - dist_an, 0.0, None).sum()) / n
    prec = (float((dist_an > margin).sum())
            + float((dist_ap < margin).sum())) * 1.0 / n
    return np.float32(loss), np.float32(prec), dist


if __name__ == "__main__":
    n, d = 8, 32
    key = jax.random.PRNGKey(0)
    inputs = jax.random.normal(key, (n, d), dtype=jnp.float32)
    # 4 identities, 2 samples each -> every row has >=1 positive and negatives.
    targets = jnp.array([0, 0, 1, 1, 2, 2, 3, 3], dtype=jnp.int32)

    loss, prec, dist = contrastive_loss(inputs, targets, margin=0.3)
    jax.block_until_ready(dist)

    # Sanity: distance matrix matches a pure-JAX reference built with the same
    # bf16-operand / f32-accumulate matmul.  The diagonal is pure cancellation
    # noise under sqrt (masked out by `eye` in the loss), so compare
    # off-diagonal entries only.
    x = inputs.astype(jnp.float32)
    xb = x.astype(jnp.bfloat16)
    sq = jnp.sum(x * x, axis=1, keepdims=True)
    gram = lax.dot_general(xb, xb, dimension_numbers=(((1,), (1,)), ((), ())),
                           preferred_element_type=jnp.float32)
    ref = jnp.sqrt(jnp.maximum(sq + sq.T - 2.0 * gram, 1e-12))
    off = 1.0 - np.eye(n, dtype=np.float32)
    np.testing.assert_allclose(np.asarray(dist) * off, np.asarray(ref) * off,
                               rtol=5e-3, atol=5e-3)
    assert np.isfinite(loss) and np.isfinite(prec)

    print("KERNEL_OK")
</pallas_src>

<mosaic_0001>
module attributes {stable_mosaic.version = 11 : i64} {
  func.func @_pdist_kernel(%arg0: i32, %arg1: i32, %arg2: memref<1xi32, #tpu.memory_space<smem>>, %arg3: memref<1xi32, #tpu.memory_space<smem>>, %arg4: memref<128x128xbf16, #tpu.memory_space<vmem>>, %arg5: memref<128x128xbf16, #tpu.memory_space<vmem>>, %arg6: memref<128x1xf32, #tpu.memory_space<vmem>>, %arg7: memref<1x128xf32, #tpu.memory_space<vmem>>, %arg8: memref<128x128xf32, #tpu.memory_space<vmem>>) attributes {dimension_semantics = [#tpu.dimension_semantics<parallel>, #tpu.dimension_semantics<arbitrary>], iteration_bounds = array<i64: 1, 1>, scalar_prefetch = 2 : i64, scratch_operands = 0 : i64, tpu.core_type = #tpu.core_type<tc>, window_params = [{transform_indices = @transform_0, window_bounds = array<i64: 128, 128>}, {transform_indices = @transform_1, window_bounds = array<i64: 128, 128>}, {transform_indices = @transform_2, window_bounds = array<i64: 128, 1>}, {transform_indices = @transform_3, window_bounds = array<i64: 1, 128>}, {transform_indices = @transform_4, window_bounds = array<i64: 128, 128>}]} {
    %c0_i32 = arith.constant 0 : i32
    %0 = arith.cmpi eq, %arg1, %c0_i32 : i32
    %1 = arith.extui %0 : i1 to i32
    %c0_i32_0 = arith.constant 0 : i32
    %2 = arith.cmpi ne, %1, %c0_i32_0 : i32
    scf.if %2 {
      %cst_10 = arith.constant 0.000000e+00 : f32
      %12 = vector.broadcast %cst_10 : f32 to vector<128x128xf32>
      %c0_11 = arith.constant 0 : index
      %c0_12 = arith.constant 0 : index
      %13 = vector.load %arg8[%c0_11, %c0_12] : memref<128x128xf32, #tpu.memory_space<vmem>>, vector<128x128xf32>
      tpu.vector_store %arg8[%c0_11, %c0_12], %12 {strides = array<i32>} : memref<128x128xf32, #tpu.memory_space<vmem>>, vector<128x128xf32>,
    } else {
    }
    %c0 = arith.constant 0 : index
    %c0_1 = arith.constant 0 : index
    %3 = vector.load %arg8[%c0, %c0_1] : memref<128x128xf32, #tpu.memory_space<vmem>>, vector<128x128xf32>
    %c0_2 = arith.constant 0 : index
    %c0_3 = arith.constant 0 : index
    %4 = vector.load %arg4[%c0_2, %c0_3] : memref<128x128xbf16, #tpu.memory_space<vmem>>, vector<128x128xbf16>
    %c0_4 = arith.constant 0 : index
    %c0_5 = arith.constant 0 : index
    %5 = vector.load %arg5[%c0_4, %c0_5] : memref<128x128xbf16, #tpu.memory_space<vmem>>, vector<128x128xbf16>
    %cst = arith.constant dense<0.000000e+00> : vector<128x128xf32>
    %6 = tpu.matmul %4, %5, %cst {dimension_numbers = #tpu.dot_dimension_numbers<[1], [1], [0], [0], [0, 0, 1, 0], [], []>} : vector<128x128xbf16>, vector<128x128xbf16>, vector<128x128xf32> -> vector<128x128xf32>
    %7 = arith.addf %3, %6 : vector<128x128xf32>
    %c0_6 = arith.constant 0 : index
    %c0_7 = arith.constant 0 : index
    %8 = vector.load %arg8[%c0_6, %c0_7] : memref<128x128xf32, #tpu.memory_space<vmem>>, vector<128x128xf32>
    tpu.vector_store %arg8[%c0_6, %c0_7], %7 {strides = array<i32>} : memref<128x128xf32, #tpu.memory_space<vmem>>, vector<128x128xf32>,
    %c0_i32_8 = arith.constant 0 : i32
    %9 = arith.cmpi eq, %arg1, %c0_i32_8 : i32
    %10 = arith.extui %9 : i1 to i32
    %c0_i32_9 = arith.constant 0 : i32
    %11 = arith.cmpi ne, %10, %c0_i32_9 : i32
    scf.if %11 {
      %c0_10 = arith.constant 0 : index
      %c0_11 = arith.constant 0 : index
      %12 = vector.load %arg6[%c0_10, %c0_11] : memref<128x1xf32, #tpu.memory_space<vmem>>, vector<128x1xf32>
      %c0_12 = arith.constant 0 : index
      %c0_13 = arith.constant 0 : index
      %13 = vector.load %arg7[%c0_12, %c0_13] : memref<1x128xf32, #tpu.memory_space<vmem>>, vector<1x128xf32>
      %14 = vector.broadcast %12 : vector<128x1xf32> to vector<128x128xf32>
      %15 = vector.broadcast %13 : vector<1x128xf32> to vector<128x128xf32>
      %16 = arith.addf %14, %15 : vector<128x128xf32>
      %c0_14 = arith.constant 0 : index
      %c0_15 = arith.constant 0 : index
      %17 = vector.load %arg8[%c0_14, %c0_15] : memref<128x128xf32, #tpu.memory_space<vmem>>, vector<128x128xf32>
      %cst_16 = arith.constant 2.000000e+00 : f32
      %18 = vector.broadcast %cst_16 : f32 to vector<128x128xf32>
      %19 = arith.mulf %18, %17 : vector<128x128xf32>
      %20 = arith.subf %16, %19 : vector<128x128xf32>
      %cst_17 = arith.constant 9.99999996E-13 : f32
      %21 = vector.broadcast %cst_17 : f32 to vector<128x128xf32>
      %22 = arith.maximumf %20, %21 : vector<128x128xf32>
      %23 = math.sqrt %22 : vector<128x128xf32>
      %c0_18 = arith.constant 0 : index
      %c0_19 = arith.constant 0 : index
      %24 = vector.load %arg8[%c0_18, %c0_19] : memref<128x128xf32, #tpu.memory_space<vmem>>, vector<128x128xf32>
      tpu.vector_store %arg8[%c0_18, %c0_19], %23 {strides = array<i32>} : memref<128x128xf32, #tpu.memory_space<vmem>>, vector<128x128xf32>,
    } else {
    }
    return
  }
  func.func @transform_0(%arg0: i32, %arg1: i32, %arg2: memref<1xi32, #tpu.memory_space<smem>>, %arg3: memref<1xi32, #tpu.memory_space<smem>>) -> (i32, i32) {
    %0 = arith.index_cast %arg0 : i32 to index
    %1 = memref.load %arg2[%0] : memref<1xi32, #tpu.memory_space<smem>>
    %c0_i32 = arith.constant 0 : i32
    return %1, %arg1 : i32, i32
  }
  func.func @transform_1(%arg0: i32, %arg1: i32, %arg2: memref<1xi32, #tpu.memory_space<smem>>, %arg3: memref<1xi32, #tpu.memory_space<smem>>) -> (i32, i32) {
    %0 = arith.index_cast %arg0 : i32 to index
    %1 = memref.load %arg3[%0] : memref<1xi32, #tpu.memory_space<smem>>
    %c0_i32 = arith.constant 0 : i32
    return %1, %arg1 : i32, i32
  }
  func.func @transform_2(%arg0: i32, %arg1: i32, %arg2: memref<1xi32, #tpu.memory_space<smem>>, %arg3: memref<1xi32, #tpu.memory_space<smem>>) -> (i32, i32) {
    %0 = arith.index_cast %arg0 : i32 to index
    %1 = memref.load %arg2[%0] : memref<1xi32, #tpu.memory_space<smem>>
    %c0_i32 = arith.constant 0 : i32
    %c0_i32_0 = arith.constant 0 : i32
    return %1, %c0_i32 : i32, i32
  }
  func.func @transform_3(%arg0: i32, %arg1: i32, %arg2: memref<1xi32, #tpu.memory_space<smem>>, %arg3: memref<1xi32, #tpu.memory_space<smem>>) -> (i32, i32) {
    %0 = arith.index_cast %arg0 : i32 to index
    %1 = memref.load %arg3[%0] : memref<1xi32, #tpu.memory_space<smem>>
    %c0_i32 = arith.constant 0 : i32
    %c0_i32_0 = arith.constant 0 : i32
    return %c0_i32, %1 : i32, i32
  }
  func.func @transform_4(%arg0: i32, %arg1: i32, %arg2: memref<1xi32, #tpu.memory_space<smem>>, %arg3: memref<1xi32, #tpu.memory_space<smem>>) -> (i32, i32) {
    %0 = arith.index_cast %arg0 : i32 to index
    %1 = memref.load %arg2[%0] : memref<1xi32, #tpu.memory_space<smem>>
    %2 = arith.index_cast %arg0 : i32 to index
    %3 = memref.load %arg3[%2] : memref<1xi32, #tpu.memory_space<smem>>
    %c0_i32 = arith.constant 0 : i32
    return %1, %3 : i32, i32
  }
}

</mosaic_0001>

<llo_original>
// kernel: tpu_custom_call.1
$region0: #{tpu_custom_call.1}
  #allocation0 [shape = 'u32[]', space=smem, size = 0x4, offset = 0x4, fixed_abs, tag = 'smem constant byte address 0x4 - core index']
  #allocation1 [shape = 'u32[144,128]{1,0:T(1,128)}', space=vmem, size = 0x12000, scoped, tag = 'internal scratch']
  #allocation2 [shape = 's32[1]{0}', space=sflag, size = 0x4, scoped, tag = 'scoped memory for tpu_custom_call.1']
  #allocation3 [shape = 's32[1]{0:T(128)S(6)}', space=smem, size = 0x200, scoped, tag = 'prefetched SMEM operand 0']
  #allocation4 [shape = 's32[1]{0:T(128)S(6)}', space=smem, size = 0x200, scoped, tag = 'prefetched SMEM operand 1']
  %s0 = inlined_call_operand.<no memory space> [shape: s32[1], index: 0, kind: input, shape index: {}]
  %s1 = inlined_call_operand.<no memory space> [shape: s32[1], index: 1, kind: input, shape index: {}]
  %s2 = inlined_call_operand.vmem [shape: bf16[128,128], index: 2, kind: input, shape index: {}]
  %s3 = inlined_call_operand.vmem [shape: bf16[128,128], index: 3, kind: input, shape index: {}]
  %s4 = inlined_call_operand.vmem [shape: f32[128,1], index: 4, kind: input, shape index: {}]
  %s5 = inlined_call_operand.vmem [shape: f32[1,128], index: 5, kind: input, shape index: {}]
  %s6 = inlined_call_operand.hbm [shape: f32[128,128], index: 6, kind: output, shape index: {}]
  %s7 = sld [smem:[#allocation0]]
  $region34: #{tpu_custom_call.1} parent=0
    _
  %s9 = ssub.s32 1, %s7
  %s10 = scalar_select 0, %s9, %s7
  %11 = sst [smem:[#allocation3]] %s0
  %12 = sst [smem:[#allocation4]] %s1
  $region1: #{tpu_custom_call.1} parent=0
    #allocation5 [shape = 'u8[65536]{0}', space=vmem, size = 0x10000, scoped, tag = 'output window, operand 0, single buffered']
    #allocation6 [shape = 's32[1]{0}', space=sflag, size = 0x4, scoped, tag = 'scoped memory for tpu_custom_call.1']
    %13 = vsyncpa [#allocation6], 0
    // Predicated region
    $region2: #{tpu_custom_call.1} parent=1 // pred_check
      _
    $region3: #{tpu_custom_call.1} parent=1 // pred_check_branch
      %15 = sbr.rel (0) target = $region5
    $region4: #{tpu_custom_call.1} parent=1 // pred_region
      %s16 = sld [smem:[#allocation3]]
      %s17 = smul.u32 16, %s16
      %p18 = scmp.lt.s32.totalorder %s17, 15
      %s19 = scalar_select %p18, %s17, 15
      %s20 = smul.addr %s19, 4
      %s21 = scalar_lea.vmem %s2, %s20
      %s22 = sld [smem:[#allocation3]]
      %s23 = smul.u32 16, %s22
    $region5: #{tpu_custom_call.1} parent=1 // pred_fallthru
      _
    // Predicated region
    $region6: #{tpu_custom_call.1} parent=1 // pred_check
      _
    $region7: #{tpu_custom_call.1} parent=1 // pred_check_branch
      %25 = sbr.rel (0) target = $region9
    $region8: #{tpu_custom_call.1} parent=1 // pred_region
      %s26 = sld [smem:[#allocation4]]
      %s27 = smul.u32 16, %s26
      %p28 = scmp.lt.s32.totalorder %s27, 15
      %s29 = scalar_select %p28, %s27, 15
      %s30 = smul.addr %s29, 4
      %s31 = scalar_lea.vmem %s3, %s30
      %s32 = sld [smem:[#allocation4]]
      %s33 = smul.u32 16, %s32
    $region9: #{tpu_custom_call.1} parent=1 // pred_fallthru
      _
    // Predicated region
    $region10: #{tpu_custom_call.1} parent=1 // pred_check
      _
    $region11: #{tpu_custom_call.1} parent=1 // pred_check_branch
      %35 = sbr.rel (0) target = $region13
    $region12: #{tpu_custom_call.1} parent=1 // pred_region
      %s36 = sld [smem:[#allocation3]]
      %s37 = smul.u32 16, %s36
      %p38 = scmp.lt.s32.totalorder %s37, 15
      %s39 = scalar_select %p38, %s37, 15
      %s40 = smul.addr %s39, 8
      %s41 = scalar_lea.vmem %s4, %s40
      %s42 = sld [smem:[#allocation3]]
      %s43 = smul.u32 16, %s42
    $region13: #{tpu_custom_call.1} parent=1 // pred_fallthru
      _
    // Predicated region
    $region14: #{tpu_custom_call.1} parent=1 // pred_check
      _
    $region15: #{tpu_custom_call.1} parent=1 // pred_check_branch
      %45 = sbr.rel (0) target = $region17
    $region16: #{tpu_custom_call.1} parent=1 // pred_region
      %s46 = sld [smem:[#allocation4]]
      %p47 = scmp.lt.s32.totalorder %s46, 0
      %s48 = scalar_select %p47, %s46, 0
      %s49 = scalar_lea.vmem %s5, %s48
      %s50 = sld [smem:[#allocation4]]
    $region17: #{tpu_custom_call.1} parent=1 // pred_fallthru
      _
    %s51 = sld [smem:[#allocation3]]
    %s52 = smul.u32 16, %s51
    %p53 = scmp.lt.s32.totalorder %s52, 15
    %s54 = scalar_select %p53, %s52, 15
    %s55 = smul.addr %s54, 4
    %s56 = scalar_lea.vmem %s2, %s55
    %s57 = sld [smem:[#allocation4]]
    %s58 = smul.u32 16, %s57
    %p59 = scmp.lt.s32.totalorder %s58, 15
    %s60 = scalar_select %p59, %s58, 15
    %s61 = smul.addr %s60, 4
    %s62 = scalar_lea.vmem %s3, %s61
    %s63 = sld [smem:[#allocation3]]
    %s64 = smul.u32 16, %s63
    %p65 = scmp.lt.s32.totalorder %s64, 15
    %s66 = scalar_select %p65, %s64, 15
    %s67 = smul.addr %s66, 8
    %s68 = scalar_lea.vmem %s4, %s67
    %s69 = sld [smem:[#allocation4]]
    %p70 = scmp.lt.s32.totalorder %s69, 0
    %s71 = scalar_select %p70, %s69, 0
    %s72 = scalar_lea.vmem %s5, %s71
    %s73 = sld [smem:[#allocation3]]
    %s74 = smul.u32 16, %s73
    %p75 = scmp.lt.s32.totalorder %s74, 15
    %s76 = scalar_select %p75, %s74, 15
    %s77 = smul.addr %s76, 4
    %s78 = scalar_lea.vmem %s2, %s77
    %s79 = sld [smem:[#allocation3]]
    %s80 = smul.u32 16, %s79
    %s81 = sld [smem:[#allocation4]]
    %s82 = smul.u32 16, %s81
    %p83 = scmp.lt.s32.totalorder %s82, 15
    %s84 = scalar_select %p83, %s82, 15
    %s85 = smul.addr %s84, 4
    %s86 = scalar_lea.vmem %s3, %s85
    %s87 = sld [smem:[#allocation4]]
    %s88 = smul.u32 16, %s87
    %s89 = sld [smem:[#allocation3]]
    %s90 = smul.u32 16, %s89
    %p91 = scmp.lt.s32.totalorder %s90, 15
    %s92 = scalar_select %p91, %s90, 15
    %s93 = smul.addr %s92, 8
    %s94 = scalar_lea.vmem %s4, %s93
    %s95 = sld [smem:[#allocation3]]
    %s96 = smul.u32 16, %s95
    %s97 = sld [smem:[#allocation4]]
    %p98 = scmp.lt.s32.totalorder %s97, 0
    %s99 = scalar_select %p98, %s97, 0
    %s100 = scalar_lea.vmem %s5, %s99
    %s101 = sld [smem:[#allocation4]]
    %s102 = sld [smem:[#allocation3]]
    %s103 = sld [smem:[#allocation4]]
    %s104 = smul.u32 16, %s102
    %p106 = scmp.eq.s32.totalorder 0, 0
    // Predicated region
    $region18: #{tpu_custom_call.1} parent=1 // pred_check
      %p107 = pneg %p106
    $region19: #{tpu_custom_call.1} parent=1 // pred_check_branch
      %109 = sbr.rel (%p107) target = $region21
    $region20: #{tpu_custom_call.1} parent=1 // pred_region
      %110 = vst [vmem:[#allocation5] sm:$0xff] 0.0
      %111 = vst [vmem:[#allocation5 + $0x8] sm:$0xff] 0.0
      %112 = vst [vmem:[#allocation5 + $0x10] sm:$0xff] 0.0
      %113 = vst [vmem:[#allocation5 + $0x18] sm:$0xff] 0.0
      %114 = vst [vmem:[#allocation5 + $0x20] sm:$0xff] 0.0
      %115 = vst [vmem:[#allocation5 + $0x28] sm:$0xff] 0.0
      %116 = vst [vmem:[#allocation5 + $0x30] sm:$0xff] 0.0
      %117 = vst [vmem:[#allocation5 + $0x38] sm:$0xff] 0.0
      %118 = vst [vmem:[#allocation5 + $0x40] sm:$0xff] 0.0
      %119 = vst [vmem:[#allocation5 + $0x48] sm:$0xff] 0.0
      %120 = vst [vmem:[#allocation5 + $0x50] sm:$0xff] 0.0
      %121 = vst [vmem:[#allocation5 + $0x58] sm:$0xff] 0.0
      %122 = vst [vmem:[#allocation5 + $0x60] sm:$0xff] 0.0
      %123 = vst [vmem:[#allocation5 + $0x68] sm:$0xff] 0.0
      %124 = vst [vmem:[#allocation5 + $0x70] sm:$0xff] 0.0
      %125 = vst [vmem:[#allocation5 + $0x78] sm:$0xff] 0.0
    $region21: #{tpu_custom_call.1} parent=1 // pred_fallthru
      _
    %v126 = vld [vmem:[#allocation5] sm:$0xff]
    %v127 = vld [vmem:[#allocation5 + $0x8] sm:$0xff]
    %v128 = vld [vmem:[#allocation5 + $0x10] sm:$0xff]
    %v129 = vld [vmem:[#allocation5 + $0x18] sm:$0xff]
    %v130 = vld [vmem:[#allocation5 + $0x20] sm:$0xff]
    %v131 = vld [vmem:[#allocation5 + $0x28] sm:$0xff]
    %v132 = vld [vmem:[#allocation5 + $0x30] sm:$0xff]
    %v133 = vld [vmem:[#allocation5 + $0x38] sm:$0xff]
    %v134 = vld [vmem:[#allocation5 + $0x40] sm:$0xff]
    %v135 = vld [vmem:[#allocation5 + $0x48] sm:$0xff]
    %v136 = vld [vmem:[#allocation5 + $0x50] sm:$0xff]
    %v137 = vld [vmem:[#allocation5 + $0x58] sm:$0xff]
    %v138 = vld [vmem:[#allocation5 + $0x60] sm:$0xff]
    %v139 = vld [vmem:[#allocation5 + $0x68] sm:$0xff]
    %v140 = vld [vmem:[#allocation5 + $0x70] sm:$0xff]
    %v141 = vld [vmem:[#allocation5 + $0x78] sm:$0xff]
    %v142 = vld [vmem:[%s78] sm:$0xf]
    %v143 = vld [vmem:[%s78 + $0x4] sm:$0xf]
    %v144 = vld [vmem:[%s78 + $0x8] sm:$0xf]
    %v145 = vld [vmem:[%s78 + $0xc] sm:$0xf]
    %v146 = vld [vmem:[%s78 + $0x10] sm:$0xf]
    %v147 = vld [vmem:[%s78 + $0x14] sm:$0xf]
    %v148 = vld [vmem:[%s78 + $0x18] sm:$0xf]
    %v149 = vld [vmem:[%s78 + $0x1c] sm:$0xf]
    %v150 = vld [vmem:[%s78 + $0x20] sm:$0xf]
    %v151 = vld [vmem:[%s78 + $0x24] sm:$0xf]
    %v152 = vld [vmem:[%s78 + $0x28] sm:$0xf]
    %v153 = vld [vmem:[%s78 + $0x2c] sm:$0xf]
    %v154 = vld [vmem:[%s78 + $0x30] sm:$0xf]
    %v155 = vld [vmem:[%s78 + $0x34] sm:$0xf]
    %v156 = vld [vmem:[%s78 + $0x38] sm:$0xf]
    %v157 = vld [vmem:[%s78 + $0x3c] sm:$0xf]
    %v158 = vld [vmem:[%s86] sm:$0xf]
    %v159 = vld [vmem:[%s86 + $0x4] sm:$0xf]
    %v160 = vld [vmem:[%s86 + $0x8] sm:$0xf]
    %v161 = vld [vmem:[%s86 + $0xc] sm:$0xf]
    %v162 = vld [vmem:[%s86 + $0x10] sm:$0xf]
    %v163 = vld [vmem:[%s86 + $0x14] sm:$0xf]
    %v164 = vld [vmem:[%s86 + $0x18] sm:$0xf]
    %v165 = vld [vmem:[%s86 + $0x1c] sm:$0xf]
    %v166 = vld [vmem:[%s86 + $0x20] sm:$0xf]
    %v167 = vld [vmem:[%s86 + $0x24] sm:$0xf]
    %v168 = vld [vmem:[%s86 + $0x28] sm:$0xf]
    %v169 = vld [vmem:[%s86 + $0x2c] sm:$0xf]
    %v170 = vld [vmem:[%s86 + $0x30] sm:$0xf]
    %v171 = vld [vmem:[%s86 + $0x34] sm:$0xf]
    %v172 = vld [vmem:[%s86 + $0x38] sm:$0xf]
    %v173 = vld [vmem:[%s86 + $0x3c] sm:$0xf]
    %v190 = vunpack.c.l.b16 %v142
    %v191 = vunpack.c.l.b16 %v143
    %v192 = vunpack.c.l.b16 %v144
    %v193 = vunpack.c.l.b16 %v145
    %v194 = vunpack.c.l.b16 %v146
    %v195 = vunpack.c.l.b16 %v147
    %v196 = vunpack.c.l.b16 %v148
    %v197 = vunpack.c.l.b16 %v149
    %v198 = vunpack.c.l.b16 %v150
    %v199 = vunpack.c.l.b16 %v151
    %v200 = vunpack.c.l.b16 %v152
    %v201 = vunpack.c.l.b16 %v153
    %v202 = vunpack.c.l.b16 %v154
    %v203 = vunpack.c.l.b16 %v155
    %v204 = vunpack.c.l.b16 %v156
    %v205 = vunpack.c.l.b16 %v157
    %v206 = vpack.c.b16 %v191, %v190
    %v207 = vpack.c.b16 %v193, %v192
    %v208 = vpack.c.b16 %v195, %v194
    %v209 = vpack.c.b16 %v197, %v196
    %v210 = vpack.c.b16 %v199, %v198
    %v211 = vpack.c.b16 %v201, %v200
    %v212 = vpack.c.b16 %v203, %v202
    %v213 = vpack.c.b16 %v205, %v204
    %v238 = vunpack.c.l.b16 %v158
    %v239 = vunpack.c.l.b16 %v159
    %v240 = vunpack.c.l.b16 %v160
    %v241 = vunpack.c.l.b16 %v161
    %v242 = vunpack.c.l.b16 %v162
    %v243 = vunpack.c.l.b16 %v163
    %v244 = vunpack.c.l.b16 %v164
    %v245 = vunpack.c.l.b16 %v165
    %v246 = vunpack.c.l.b16 %v166
    %v247 = vunpack.c.l.b16 %v167
    %v248 = vunpack.c.l.b16 %v168
    %v249 = vunpack.c.l.b16 %v169
    %v250 = vunpack.c.l.b16 %v170
    %v251 = vunpack.c.l.b16 %v171
    %v252 = vunpack.c.l.b16 %v172
    %v253 = vunpack.c.l.b16 %v173
    %v254 = vpack.c.b16 %v239, %v238
    %v255 = vpack.c.b16 %v241, %v240
    %v256 = vpack.c.b16 %v243, %v242
    %v257 = vpack.c.b16 %v245, %v244
    %v258 = vpack.c.b16 %v247, %v246
    %v259 = vpack.c.b16 %v249, %v248
    %v260 = vpack.c.b16 %v251, %v250
    %v261 = vpack.c.b16 %v253, %v252
    %270 = vmatprep.subr.bf16.mxu0 0
    %271 = vmatpush1.bf16.xpose.msra.mxu0 %v254
    %272 = vmatprep.subr.bf16.mxu0 0
    %273 = vmatpush1.bf16.xpose.msra.mxu0 %v255
    %274 = vmatprep.subr.bf16.mxu0 0
    %275 = vmatpush1.bf16.xpose.msra.mxu0 %v256
    %276 = vmatprep.subr.bf16.mxu0 0
    %277 = vmatpush1.bf16.xpose.msra.mxu0 %v257
    %278 = vmatprep.subr.bf16.mxu0 0
    %279 = vmatpush1.bf16.xpose.msra.mxu0 %v258
    %280 = vmatprep.subr.bf16.mxu0 0
    %281 = vmatpush1.bf16.xpose.msra.mxu0 %v259
    %282 = vmatprep.subr.bf16.mxu0 0
    %283 = vmatpush1.bf16.xpose.msra.mxu0 %v260
    %284 = vmatprep.subr.bf16.mxu0 0
    %285 = vmatpush1.bf16.xpose.msra.mxu0 %v261
    %286 = vmatprep.subr.bf16.mxu0 0
    %287 = vmatpush1.bf16.xpose.msra.mxu0 0
    %288 = vmatprep.subr.bf16.mxu0 0
    %289 = vmatpush1.bf16.xpose.msra.mxu0 0
    %290 = vmatprep.subr.bf16.mxu0 0
    %291 = vmatpush1.bf16.xpose.msra.mxu0 0
    %292 = vmatprep.subr.bf16.mxu0 0
    %293 = vmatpush1.bf16.xpose.msra.mxu0 0
    %294 = vmatprep.subr.bf16.mxu0 0
    %295 = vmatpush1.bf16.xpose.msra.mxu0 0
    %296 = vmatprep.subr.bf16.mxu0 0
    %297 = vmatpush1.bf16.xpose.msra.mxu0 0
    %298 = vmatprep.subr.bf16.mxu0 0
    %299 = vmatpush1.bf16.xpose.msra.mxu0 0
    %300 = vmatprep.subr.bf16.mxu0 0
    %301 = vmatpush1.bf16.xpose.msra.mxu0 0
    %302 = vmatprep.mubr.bf16.mxu0 0
    %303 = vmatmul.mubr.bf16.gmra.mrb[0].mxu0 %v206
    %v304 = vpop.f32.mrb[0].mxu0
    %v305 = vadd.f32 0.0, %v304
    %v306 = vpop.f32.mrb[0].mxu0
    %v307 = vpop.f32.mrb[0].mxu0
    %v308 = vadd.f32 0.0, %v307
    %v309 = vpop.f32.mrb[0].mxu0
    %310 = vmatprep.mubr.bf16.mxu0 0
    %311 = vmatmul.mubr.bf16.gmra.mrb[0].mxu0 %v207
    %v312 = vpop.f32.mrb[0].mxu0
    %v313 = vadd.f32 0.0, %v312
    %v314 = vpop.f32.mrb[0].mxu0
    %v315 = vpop.f32.mrb[0].mxu0
    %v316 = vadd.f32 0.0, %v315
    %v317 = vpop.f32.mrb[0].mxu0
    %318 = vmatprep.mubr.bf16.mxu0 0
    %319 = vmatmul.mubr.bf16.gmra.mrb[0].mxu0 %v208
    %v320 = vpop.f32.mrb[0].mxu0
    %v321 = vadd.f32 0.0, %v320
    %v322 = vpop.f32.mrb[0].mxu0
    %v323 = vpop.f32.mrb[0].mxu0
    %v324 = vadd.f32 0.0, %v323
    %v325 = vpop.f32.mrb[0].mxu0
    %326 = vmatprep.mubr.bf16.mxu0 0
    %327 = vmatmul.mubr.bf16.gmra.mrb[0].mxu0 %v209
    %v328 = vpop.f32.mrb[0].mxu0
    %v329 = vadd.f32 0.0, %v328
    %v330 = vpop.f32.mrb[0].mxu0
    %v331 = vpop.f32.mrb[0].mxu0
    %v332 = vadd.f32 0.0, %v331
    %v333 = vpop.f32.mrb[0].mxu0
    %334 = vmatprep.mubr.bf16.mxu0 0
    %335 = vmatmul.mubr.bf16.gmra.mrb[0].mxu0 %v210
    %v336 = vpop.f32.mrb[0].mxu0
    %v337 = vadd.f32 0.0, %v336
    %v338 = vpop.f32.mrb[0].mxu0
    %v339 = vpop.f32.mrb[0].mxu0
    %v340 = vadd.f32 0.0, %v339
    %v341 = vpop.f32.mrb[0].mxu0
    %342 = vmatprep.mubr.bf16.mxu0 0
    %343 = vmatmul.mubr.bf16.gmra.mrb[0].mxu0 %v211
    %v344 = vpop.f32.mrb[0].mxu0
    %v345 = vadd.f32 0.0, %v344
    %v346 = vpop.f32.mrb[0].mxu0
    %v347 = vpop.f32.mrb[0].mxu0
    %v348 = vadd.f32 0.0, %v347
    %v349 = vpop.f32.mrb[0].mxu0
    %350 = vmatprep.mubr.bf16.mxu0 0
    %351 = vmatmul.mubr.bf16.gmra.mrb[0].mxu0 %v212
    %v352 = vpop.f32.mrb[0].mxu0
    %v353 = vadd.f32 0.0, %v352
    %v354 = vpop.f32.mrb[0].mxu0
    %v355 = vpop.f32.mrb[0].mxu0
    %v356 = vadd.f32 0.0, %v355
    %v357 = vpop.f32.mrb[0].mxu0
    %358 = vmatprep.mubr.bf16.mxu0 0
    %359 = vmatmul.mubr.bf16.gmra.mrb[0].mxu0 %v213
    %v360 = vpop.f32.mrb[0].mxu0
    %v361 = vadd.f32 0.0, %v360
    %v362 = vpop.f32.mrb[0].mxu0
    %v363 = vpop.f32.mrb[0].mxu0
    %v364 = vadd.f32 0.0, %v363
    %v365 = vpop.f32.mrb[0].mxu0
    %366 = vdwg.mxu0
    %v367 = vadd.f32 %v126, %v305
    %v368 = vadd.f32 %v127, %v308
    %v369 = vadd.f32 %v128, %v313
    %v370 = vadd.f32 %v129, %v316
    %v371 = vadd.f32 %v130, %v321
    %v372 = vadd.f32 %v131, %v324
    %v373 = vadd.f32 %v132, %v329
    %v374 = vadd.f32 %v133, %v332
    %v375 = vadd.f32 %v134, %v337
    %v376 = vadd.f32 %v135, %v340
    %v377 = vadd.f32 %v136, %v345
    %v378 = vadd.f32 %v137, %v348
    %v379 = vadd.f32 %v138, %v353
    %v380 = vadd.f32 %v139, %v356
    %v381 = vadd.f32 %v140, %v361
    %v382 = vadd.f32 %v141, %v364
    %383 = vst [vmem:[#allocation5] sm:$0xff] %v367
    %384 = vst [vmem:[#allocation5 + $0x8] sm:$0xff] %v368
    %385 = vst [vmem:[#allocation5 + $0x10] sm:$0xff] %v369
    %386 = vst [vmem:[#allocation5 + $0x18] sm:$0xff] %v370
    %387 = vst [vmem:[#allocation5 + $0x20] sm:$0xff] %v371
    %388 = vst [vmem:[#allocation5 + $0x28] sm:$0xff] %v372
    %389 = vst [vmem:[#allocation5 + $0x30] sm:$0xff] %v373
    %390 = vst [vmem:[#allocation5 + $0x38] sm:$0xff] %v374
    %391 = vst [vmem:[#allocation5 + $0x40] sm:$0xff] %v375
    %392 = vst [vmem:[#allocation5 + $0x48] sm:$0xff] %v376
    %393 = vst [vmem:[#allocation5 + $0x50] sm:$0xff] %v377
    %394 = vst [vmem:[#allocation5 + $0x58] sm:$0xff] %v378
    %395 = vst [vmem:[#allocation5 + $0x60] sm:$0xff] %v379
    %396 = vst [vmem:[#allocation5 + $0x68] sm:$0xff] %v380
    %397 = vst [vmem:[#allocation5 + $0x70] sm:$0xff] %v381
    %398 = vst [vmem:[#allocation5 + $0x78] sm:$0xff] %v382
    // Predicated region
    $region22: #{tpu_custom_call.1} parent=1 // pred_check
      %p399 = pneg %p106
    $region23: #{tpu_custom_call.1} parent=1 // pred_check_branch
      %401 = sbr.rel (%p399) target = $region25
    $region24: #{tpu_custom_call.1} parent=1 // pred_region
      %v402 = vld [vmem:[%s94] sm:$0xff]
      %v403 = vld [vmem:[%s94 + $0x8] sm:$0xff]
      %v404 = vld [vmem:[%s94 + $0x10] sm:$0xff]
      %v405 = vld [vmem:[%s94 + $0x18] sm:$0xff]
      %v406 = vld [vmem:[%s94 + $0x20] sm:$0xff]
      %v407 = vld [vmem:[%s94 + $0x28] sm:$0xff]
      %v408 = vld [vmem:[%s94 + $0x30] sm:$0xff]
      %v409 = vld [vmem:[%s94 + $0x38] sm:$0xff]
      %v410 = vld [vmem:[%s94 + $0x40] sm:$0xff]
      %v411 = vld [vmem:[%s94 + $0x48] sm:$0xff]
      %v412 = vld [vmem:[%s94 + $0x50] sm:$0xff]
      %v413 = vld [vmem:[%s94 + $0x58] sm:$0xff]
      %v414 = vld [vmem:[%s94 + $0x60] sm:$0xff]
      %v415 = vld [vmem:[%s94 + $0x68] sm:$0xff]
      %v416 = vld [vmem:[%s94 + $0x70] sm:$0xff]
      %v417 = vld [vmem:[%s94 + $0x78] sm:$0xff]
      %v418 = vld [vmem:[%s100] sm:$0x1]
      %420 = vset.pattern.permute.xlu0 0
      %421 = vperm.xlu0 %420, %v402
      %v422 = vpop.permute.xlu0 %421
      %425 = vset.pattern.permute.xlu0 0
      %426 = vperm.xlu0 %425, %v403
      %v427 = vpop.permute.xlu0 %426
      %430 = vset.pattern.permute.xlu0 0
      %431 = vperm.xlu0 %430, %v404
      %v432 = vpop.permute.xlu0 %431
      %435 = vset.pattern.permute.xlu0 0
      %436 = vperm.xlu0 %435, %v405
      %v437 = vpop.permute.xlu0 %436
      %440 = vset.pattern.permute.xlu0 0
      %441 = vperm.xlu0 %440, %v406
      %v442 = vpop.permute.xlu0 %441
      %445 = vset.pattern.permute.xlu0 0
      %446 = vperm.xlu0 %445, %v407
      %v447 = vpop.permute.xlu0 %446
      %450 = vset.pattern.permute.xlu0 0
      %451 = vperm.xlu0 %450, %v408
      %v452 = vpop.permute.xlu0 %451
      %455 = vset.pattern.permute.xlu0 0
      %456 = vperm.xlu0 %455, %v409
      %v457 = vpop.permute.xlu0 %456
      %460 = vset.pattern.permute.xlu0 0
      %461 = vperm.xlu0 %460, %v410
      %v462 = vpop.permute.xlu0 %461
      %465 = vset.pattern.permute.xlu0 0
      %466 = vperm.xlu0 %465, %v411
      %v467 = vpop.permute.xlu0 %466
      %470 = vset.pattern.permute.xlu0 0
      %471 = vperm.xlu0 %470, %v412
      %v472 = vpop.permute.xlu0 %471
      %475 = vset.pattern.permute.xlu0 0
      %476 = vperm.xlu0 %475, %v413
      %v477 = vpop.permute.xlu0 %476
      %480 = vset.pattern.permute.xlu0 0
      %481 = vperm.xlu0 %480, %v414
      %v482 = vpop.permute.xlu0 %481
      %485 = vset.pattern.permute.xlu0 0
      %486 = vperm.xlu0 %485, %v415
      %v487 = vpop.permute.xlu0 %486
      %490 = vset.pattern.permute.xlu0 0
      %491 = vperm.xlu0 %490, %v416
      %v492 = vpop.permute.xlu0 %491
      %495 = vset.pattern.permute.xlu0 0
      %496 = vperm.xlu0 %495, %v417
      %v497 = vpop.permute.xlu0 %496
      %v500 = vlaneseq
      %v501 = vshrl.u32 %v500, 7
      %v502 = vsub.s32 0, %v501
      %v503 = vrot.slane %v418, %v502
      %v505 = vadd.f32 %v422, %v503
      %v506 = vadd.f32 %v427, %v503
      %v507 = vadd.f32 %v432, %v503
      %v508 = vadd.f32 %v437, %v503
      %v509 = vadd.f32 %v442, %v503
      %v510 = vadd.f32 %v447, %v503
      %v511 = vadd.f32 %v452, %v503
      %v512 = vadd.f32 %v457, %v503
      %v513 = vadd.f32 %v462, %v503
      %v514 = vadd.f32 %v467, %v503
      %v515 = vadd.f32 %v472, %v503
      %v516 = vadd.f32 %v477, %v503
      %v517 = vadd.f32 %v482, %v503
      %v518 = vadd.f32 %v487, %v503
      %v519 = vadd.f32 %v492, %v503
      %v520 = vadd.f32 %v497, %v503
      %v521 = vld [vmem:[#allocation5] sm:$0xff]
      %v522 = vld [vmem:[#allocation5 + $0x8] sm:$0xff]
      %v523 = vld [vmem:[#allocation5 + $0x10] sm:$0xff]
      %v524 = vld [vmem:[#allocation5 + $0x18] sm:$0xff]
      %v525 = vld [vmem:[#allocation5 + $0x20] sm:$0xff]
      %v526 = vld [vmem:[#allocation5 + $0x28] sm:$0xff]
      %v527 = vld [vmem:[#allocation5 + $0x30] sm:$0xff]
      %v528 = vld [vmem:[#allocation5 + $0x38] sm:$0xff]
      %v529 = vld [vmem:[#allocation5 + $0x40] sm:$0xff]
      %v530 = vld [vmem:[#allocation5 + $0x48] sm:$0xff]
      %v531 = vld [vmem:[#allocation5 + $0x50] sm:$0xff]
      %v532 = vld [vmem:[#allocation5 + $0x58] sm:$0xff]
      %v533 = vld [vmem:[#allocation5 + $0x60] sm:$0xff]
      %v534 = vld [vmem:[#allocation5 + $0x68] sm:$0xff]
      %v535 = vld [vmem:[#allocation5 + $0x70] sm:$0xff]
      %v536 = vld [vmem:[#allocation5 + $0x78] sm:$0xff]
      %v537 = vmul.f32 %v521, 2.0
      %v538 = vmul.f32 %v522, 2.0
      %v539 = vmul.f32 %v523, 2.0
      %v540 = vmul.f32 %v524, 2.0
      %v541 = vmul.f32 %v525, 2.0
      %v542 = vmul.f32 %v526, 2.0
      %v543 = vmul.f32 %v527, 2.0
      %v544 = vmul.f32 %v528, 2.0
      %v545 = vmul.f32 %v529, 2.0
      %v546 = vmul.f32 %v530, 2.0
      %v547 = vmul.f32 %v531, 2.0
      %v548 = vmul.f32 %v532, 2.0
      %v549 = vmul.f32 %v533, 2.0
      %v550 = vmul.f32 %v534, 2.0
      %v551 = vmul.f32 %v535, 2.0
      %v552 = vmul.f32 %v536, 2.0
      %v553 = vsub.f32 %v505, %v537
      %v554 = vsub.f32 %v506, %v538
      %v555 = vsub.f32 %v507, %v539
      %v556 = vsub.f32 %v508, %v540
      %v557 = vsub.f32 %v509, %v541
      %v558 = vsub.f32 %v510, %v542
      %v559 = vsub.f32 %v511, %v543
      %v560 = vsub.f32 %v512, %v544
      %v561 = vsub.f32 %v513, %v545
      %v562 = vsub.f32 %v514, %v546
      %v563 = vsub.f32 %v515, %v547
      %v564 = vsub.f32 %v516, %v548
      %v565 = vsub.f32 %v517, %v549
      %v566 = vsub.f32 %v518, %v550
      %v567 = vsub.f32 %v519, %v551
      %v568 = vsub.f32 %v520, %v552
      %v569 = vmax.f32 %v553, 1e-12
      %v570 = vmax.f32 %v554, 1e-12
      %v571 = vmax.f32 %v555, 1e-12
      %v572 = vmax.f32 %v556, 1e-12
      %v573 = vmax.f32 %v557, 1e-12
      %v574 = vmax.f32 %v558, 1e-12
      %v575 = vmax.f32 %v559, 1e-12
      %v576 = vmax.f32 %v560, 1e-12
      %v577 = vmax.f32 %v561, 1e-12
      %v578 = vmax.f32 %v562, 1e-12
      %v579 = vmax.f32 %v563, 1e-12
      %v580 = vmax.f32 %v564, 1e-12
      %v581 = vmax.f32 %v565, 1e-12
      %v582 = vmax.f32 %v566, 1e-12
      %v583 = vmax.f32 %v567, 1e-12
      %v584 = vmax.f32 %v568, 1e-12
      %v585 = vrsqrt.pop %v569
      %v586 = vmul.f32 %v569, %v585
      %vm587 = vcmp.eq.f32.partialorder %v569, inf
      %v588 = vsel %vm587, %v569, %v586
      %vm589 = vcmp.eq.f32.partialorder %v569, 0.0
      %v590 = vand.u32 %v569, 2147483648
      %v591 = vsel %vm589, %v590, %v588
      %v592 = vrsqrt.pop %v570
      %v593 = vmul.f32 %v570, %v592
      %vm594 = vcmp.eq.f32.partialorder %v570, inf
      %v595 = vsel %vm594, %v570, %v593
      %vm596 = vcmp.eq.f32.partialorder %v570, 0.0
      %v597 = vand.u32 %v570, 2147483648
      %v598 = vsel %vm596, %v597, %v595
      %v599 = vrsqrt.pop %v571
      %v600 = vmul.f32 %v571, %v599
      %vm601 = vcmp.eq.f32.partialorder %v571, inf
      %v602 = vsel %vm601, %v571, %v600
      %vm603 = vcmp.eq.f32.partialorder %v571, 0.0
      %v604 = vand.u32 %v571, 2147483648
      %v605 = vsel %vm603, %v604, %v602
      %v606 = vrsqrt.pop %v572
      %v607 = vmul.f32 %v572, %v606
      %vm608 = vcmp.eq.f32.partialorder %v572, inf
      %v609 = vsel %vm608, %v572, %v607
      %vm610 = vcmp.eq.f32.partialorder %v572, 0.0
      %v611 = vand.u32 %v572, 2147483648
      %v612 = vsel %vm610, %v611, %v609
      %v613 = vrsqrt.pop %v573
      %v614 = vmul.f32 %v573, %v613
      %vm615 = vcmp.eq.f32.partialorder %v573, inf
      %v616 = vsel %vm615, %v573, %v614
      %vm617 = vcmp.eq.f32.partialorder %v573, 0.0
      %v618 = vand.u32 %v573, 2147483648
      %v619 = vsel %vm617, %v618, %v616
      %v620 = vrsqrt.pop %v574
      %v621 = vmul.f32 %v574, %v620
      %vm622 = vcmp.eq.f32.partialorder %v574, inf
      %v623 = vsel %vm622, %v574, %v621
      %vm624 = vcmp.eq.f32.partialorder %v574, 0.0
      %v625 = vand.u32 %v574, 2147483648
      %v626 = vsel %vm624, %v625, %v623
      %v627 = vrsqrt.pop %v575
      %v628 = vmul.f32 %v575, %v627
      %vm629 = vcmp.eq.f32.partialorder %v575, inf
      %v630 = vsel %vm629, %v575, %v628
      %vm631 = vcmp.eq.f32.partialorder %v575, 0.0
      %v632 = vand.u32 %v575, 2147483648
      %v633 = vsel %vm631, %v632, %v630
      %v634 = vrsqrt.pop %v576
      %v635 = vmul.f32 %v576, %v634
      %vm636 = vcmp.eq.f32.partialorder %v576, inf
      %v637 = vsel %vm636, %v576, %v635
      %vm638 = vcmp.eq.f32.partialorder %v576, 0.0
      %v639 = vand.u32 %v576, 2147483648
      %v640 = vsel %vm638, %v639, %v637
      %v641 = vrsqrt.pop %v577
      %v642 = vmul.f32 %v577, %v641
      %vm643 = vcmp.eq.f32.partialorder %v577, inf
      %v644 = vsel %vm643, %v577, %v642
      %vm645 = vcmp.eq.f32.partialorder %v577, 0.0
      %v646 = vand.u32 %v577, 2147483648
      %v647 = vsel %vm645, %v646, %v644
      %v648 = vrsqrt.pop %v578
      %v649 = vmul.f32 %v578, %v648
      %vm650 = vcmp.eq.f32.partialorder %v578, inf
      %v651 = vsel %vm650, %v578, %v649
      %vm652 = vcmp.eq.f32.partialorder %v578, 0.0
      %v653 = vand.u32 %v578, 2147483648
      %v654 = vsel %vm652, %v653, %v651
      %v655 = vrsqrt.pop %v579
      %v656 = vmul.f32 %v579, %v655
      %vm657 = vcmp.eq.f32.partialorder %v579, inf
      %v658 = vsel %vm657, %v579, %v656
      %vm659 = vcmp.eq.f32.partialorder %v579, 0.0
      %v660 = vand.u32 %v579, 2147483648
      %v661 = vsel %vm659, %v660, %v658
      %v662 = vrsqrt.pop %v580
      %v663 = vmul.f32 %v580, %v662
      %vm664 = vcmp.eq.f32.partialorder %v580, inf
      %v665 = vsel %vm664, %v580, %v663
      %vm666 = vcmp.eq.f32.partialorder %v580, 0.0
      %v667 = vand.u32 %v580, 2147483648
      %v668 = vsel %vm666, %v667, %v665
      %v669 = vrsqrt.pop %v581
      %v670 = vmul.f32 %v581, %v669
      %vm671 = vcmp.eq.f32.partialorder %v581, inf
      %v672 = vsel %vm671, %v581, %v670
      %vm673 = vcmp.eq.f32.partialorder %v581, 0.0
      %v674 = vand.u32 %v581, 2147483648
      %v675 = vsel %vm673, %v674, %v672
      %v676 = vrsqrt.pop %v582
      %v677 = vmul.f32 %v582, %v676
      %vm678 = vcmp.eq.f32.partialorder %v582, inf
      %v679 = vsel %vm678, %v582, %v677
      %vm680 = vcmp.eq.f32.partialorder %v582, 0.0
      %v681 = vand.u32 %v582, 2147483648
      %v682 = vsel %vm680, %v681, %v679
      %v683 = vrsqrt.pop %v583
      %v684 = vmul.f32 %v583, %v683
      %vm685 = vcmp.eq.f32.partialorder %v583, inf
      %v686 = vsel %vm685, %v583, %v684
      %vm687 = vcmp.eq.f32.partialorder %v583, 0.0
      %v688 = vand.u32 %v583, 2147483648
      %v689 = vsel %vm687, %v688, %v686
      %v690 = vrsqrt.pop %v584
      %v691 = vmul.f32 %v584, %v690
      %vm692 = vcmp.eq.f32.partialorder %v584, inf
      %v693 = vsel %vm692, %v584, %v691
      %vm694 = vcmp.eq.f32.partialorder %v584, 0.0
      %v695 = vand.u32 %v584, 2147483648
      %v696 = vsel %vm694, %v695, %v693
      %697 = vst [vmem:[#allocation5] sm:$0xff] %v591
      %698 = vst [vmem:[#allocation5 + $0x8] sm:$0xff] %v598
      %699 = vst [vmem:[#allocation5 + $0x10] sm:$0xff] %v605
      %700 = vst [vmem:[#allocation5 + $0x18] sm:$0xff] %v612
      %701 = vst [vmem:[#allocation5 + $0x20] sm:$0xff] %v619
      %702 = vst [vmem:[#allocation5 + $0x28] sm:$0xff] %v626
      %703 = vst [vmem:[#allocation5 + $0x30] sm:$0xff] %v633
      %704 = vst [vmem:[#allocation5 + $0x38] sm:$0xff] %v640
      %705 = vst [vmem:[#allocation5 + $0x40] sm:$0xff] %v647
      %706 = vst [vmem:[#allocation5 + $0x48] sm:$0xff] %v654
      %707 = vst [vmem:[#allocation5 + $0x50] sm:$0xff] %v661
      %708 = vst [vmem:[#allocation5 + $0x58] sm:$0xff] %v668
      %709 = vst [vmem:[#allocation5 + $0x60] sm:$0xff] %v675
      %710 = vst [vmem:[#allocation5 + $0x68] sm:$0xff] %v682
      %711 = vst [vmem:[#allocation5 + $0x70] sm:$0xff] %v689
      %712 = vst [vmem:[#allocation5 + $0x78] sm:$0xff] %v696
    $region25: #{tpu_custom_call.1} parent=1 // pred_fallthru
      _
    // Predicated region
    $region26: #{tpu_custom_call.1} parent=1 // pred_check
      _
    $region27: #{tpu_custom_call.1} parent=1 // pred_check_branch
      %714 = sbr.rel (0) target = $region29
    $region28: #{tpu_custom_call.1} parent=1 // pred_region
      %s715 = sld [smem:[#allocation3]]
      %s716 = sld [smem:[#allocation4]]
      %s717 = smul.u32 16, %s715
      %s719 = ssub.s32 2048, 2048
      %720 = vsyncadd [#allocation6], %s719
      %s721 = sadd.s32 %s716, %s717
      %s722 = smul.addr %s721, 128
      %s723 = scalar_lea.hbm %s6, %s722
      %s724 = sshll.u32 [#allocation5], 4
      %s725 = int_to_ptr.vmem [resolvable:$true] %s724
      %730 = dma.vmem_to_hbm [thread:$0]  %s725, 2048, %s723, [#allocation6], 128, 128, 8
    $region29: #{tpu_custom_call.1} parent=1 // pred_fallthru
      _
    // Predicated region
    $region30: #{tpu_custom_call.1} parent=1 // pred_check
      _
    $region31: #{tpu_custom_call.1} parent=1 // pred_check_branch
      %732 = sbr.rel (0) target = $region33
    $region32: #{tpu_custom_call.1} parent=1 // pred_region
      %733 = dma.done [#allocation6], 2048
    $region33: #{tpu_custom_call.1} parent=1 // pred_fallthru
      _
    %734 = vsyncpa [#allocation6], 1

</llo_original>
